<compile_context>
chip_gen: v7x
topology: tpu7x:2x2x1
jax: 0.10.0
libtpu: 0.0.40
codegen_flags: <defaults>
</compile_context>

<pallas_src>
import jax
import jax.numpy as jnp
from jax.experimental import pallas as pl
from jax.experimental.pallas import tpu as pltpu


def _round_up(x, m):
    return ((x + m - 1) // m) * m


def _make_kernel(d_total, block_d, need_mask):
    """Builds the kernel; d_total/block_d/need_mask are trace-time constants."""

    def kernel(u_ref, v_ref, o_ref, acc_ref):
        # u_ref, v_ref: (block_b, block_d) tiles; o_ref: (1, block_b) lane-dense;
        # acc_ref: (1, block_b) f32 accumulator, lives across the D (k) axis.
        k = pl.program_id(1)

        @pl.when(k == 0)
        def _init():
            acc_ref[...] = jnp.zeros_like(acc_ref)

        # Upcast so bf16 (or narrower) inputs accumulate in f32.
        u = u_ref[...].astype(jnp.float32)
        v = v_ref[...].astype(jnp.float32)
        prod = u * v

        if need_mask:
            # Last D tile is partial: zero the out-of-range lanes so garbage
            # in the padded part of the VMEM tile cannot corrupt the row sums.
            lane = jax.lax.broadcasted_iota(jnp.int32, prod.shape, 1)
            prod = jnp.where(lane + k * block_d < d_total, prod, 0.0)

        # Per-row partial dot products, accumulated lane-major so the final
        # store is a dense (1, block_b) store rather than block_b masked stores.
        partial = jnp.sum(prod, axis=-1)      # (block_b,)
        acc_ref[...] += partial[None, :]      # (1, block_b)

        @pl.when(k == pl.num_programs(1) - 1)
        def _finalize():
            o_ref[...] = acc_ref[...].astype(o_ref.dtype)

    return kernel


def dot_product_decoder(u, v, *, block_b=None, block_d=None, out_dtype=None,
                        vmem_budget_bytes=8 * 1024 * 1024):
    """Per-row dot products (DotProductDecoder forward).

    u, v: (B, D) arrays of the same shape/dtype. Returns (B,) scores.
    """
    assert u.shape == v.shape, "Shape mismatch between u and v"
    assert u.ndim == 2, "expected (B, D) inputs"
    B, D = u.shape
    if out_dtype is None:
        out_dtype = u.dtype  # match torch: output dtype follows input dtype
    itemsize = jnp.dtype(u.dtype).itemsize
    row_align = {1: 32, 2: 16}.get(itemsize, 8)

    # ---- batch tile: 512-1024 rows is near the HBM roofline; never default
    # ---- to the whole batch (VMEM blowup or a 1-step grid).
    if block_b is None:
        block_b = min(1024, _round_up(B, row_align))
        if B > 512:
            # Prefer >= 2 batch tiles so ("parallel", ...) can shard across the
            # two v7x TensorCores and the DMA pipeline has steps to overlap.
            block_b = min(block_b, _round_up(pl.cdiv(B, 2), row_align))
    block_b = max(row_align, _round_up(block_b, row_align))

    # ---- D tile: keep 2 inputs x 2 pipeline buffers under the VMEM budget.
    if block_d is None:
        max_d = vmem_budget_bytes // (4 * block_b * itemsize)
        if D <= 128 or D <= max_d:
            block_d = D
        else:
            block_d = max(128, (max_d // 128) * 128)  # lane-aligned reduction tile
    block_d = min(block_d, D)

    nb = pl.cdiv(B, block_b)
    nk = pl.cdiv(D, block_d)
    need_mask = (D % block_d) != 0

    kernel = _make_kernel(D, block_d, need_mask)

    out = pl.pallas_call(
        kernel,
        out_shape=jax.ShapeDtypeStruct((nb, 1, block_b), out_dtype),
        grid_spec=pltpu.PrefetchScalarGridSpec(
            num_scalar_prefetch=0,
            grid=(nb, nk),  # reduction (D) axis last
            in_specs=[
                pl.BlockSpec((block_b, block_d), lambda i, k: (i, k)),
                pl.BlockSpec((block_b, block_d), lambda i, k: (i, k)),
            ],
            # Lane-dense output slab: one (1, block_b) row per batch tile,
            # resident across the k (reduction) axis.
            out_specs=pl.BlockSpec((None, 1, block_b), lambda i, k: (i, 0, 0)),
            scratch_shapes=[pltpu.VMEM((1, block_b), jnp.float32)],
        ),
        compiler_params=pltpu.CompilerParams(
            dimension_semantics=("parallel", "arbitrary"),
        ),
    )(u, v)

    # (nb, 1, block_b) -> (nb*block_b,) -> drop padded tail rows.
    return out.reshape(nb * block_b)[:B]


if __name__ == "__main__":
    key = jax.random.PRNGKey(0)
    ku, kv, ka, kb = jax.random.split(key, 4)

    # Spec-sized example: B edges, D-dim node embeddings.
    B, D = 8, 32
    u = jax.random.normal(ku, (B, D), dtype=jnp.float32)
    v = jax.random.normal(kv, (B, D), dtype=jnp.float32)
    score = jax.block_until_ready(dot_product_decoder(u, v))
    ref = jnp.sum(u * v, axis=-1)  # same math as torch.einsum('bi,bi->b', u, v)
    assert score.shape == (B,)
    assert jnp.allclose(score, ref, atol=1e-5, rtol=1e-5)

    # Exercise the tiled / masked / partial-tile paths at small shapes:
    # B not a multiple of block_b, D not a multiple of block_d.
    B2, D2 = 24, 160
    u2 = jax.random.normal(ka, (B2, D2), dtype=jnp.float32)
    v2 = jax.random.normal(kb, (B2, D2), dtype=jnp.float32)
    score2 = jax.block_until_ready(
        dot_product_decoder(u2, v2, block_b=16, block_d=128))
    ref2 = jnp.sum(u2 * v2, axis=-1)
    assert score2.shape == (B2,)
    assert jnp.allclose(score2, ref2, atol=1e-4, rtol=1e-4)

    print("KERNEL_OK")
</pallas_src>

<mosaic_0001>
module attributes {stable_mosaic.version = 11 : i64} {
  func.func @kernel(%arg0: i32, %arg1: i32, %arg2: memref<8x32xf32, #tpu.memory_space<vmem>>, %arg3: memref<8x32xf32, #tpu.memory_space<vmem>>, %arg4: memref<1x1x8xf32, #tpu.memory_space<vmem>>, %arg5: memref<1x8xf32, #tpu.memory_space<vmem>>) attributes {dimension_semantics = [#tpu.dimension_semantics<parallel>, #tpu.dimension_semantics<arbitrary>], iteration_bounds = array<i64: 1, 1>, scalar_prefetch = 0 : i64, scratch_operands = 1 : i64, tpu.core_type = #tpu.core_type<tc>, window_params = [{transform_indices = @transform_0, window_bounds = array<i64: 8, 32>}, {transform_indices = @transform_1, window_bounds = array<i64: 8, 32>}, {transform_indices = @transform_2, window_bounds = array<i64: 1, 1, 8>}]} {
    %c0_i32 = arith.constant 0 : i32
    %0 = arith.cmpi eq, %arg1, %c0_i32 : i32
    %1 = arith.extui %0 : i1 to i32
    %c0_i32_0 = arith.constant 0 : i32
    %2 = arith.cmpi ne, %1, %c0_i32_0 : i32
    scf.if %2 {
      %cst_10 = arith.constant 0.000000e+00 : f32
      %14 = vector.broadcast %cst_10 : f32 to vector<1x8xf32>
      %c0_11 = arith.constant 0 : index
      %c0_12 = arith.constant 0 : index
      %15 = vector.load %arg5[%c0_11, %c0_12] : memref<1x8xf32, #tpu.memory_space<vmem>>, vector<1x8xf32>
      tpu.vector_store %arg5[%c0_11, %c0_12], %14 {strides = array<i32>} : memref<1x8xf32, #tpu.memory_space<vmem>>, vector<1x8xf32>,
    } else {
    }
    %c0 = arith.constant 0 : index
    %c0_1 = arith.constant 0 : index
    %3 = vector.load %arg2[%c0, %c0_1] : memref<8x32xf32, #tpu.memory_space<vmem>>, vector<8x32xf32>
    %c0_2 = arith.constant 0 : index
    %c0_3 = arith.constant 0 : index
    %4 = vector.load %arg3[%c0_2, %c0_3] : memref<8x32xf32, #tpu.memory_space<vmem>>, vector<8x32xf32>
    %5 = arith.mulf %3, %4 : vector<8x32xf32>
    %cst = arith.constant dense<0.000000e+00> : vector<8xf32>
    %6 = vector.multi_reduction <add>, %5, %cst [1] : vector<8x32xf32> to vector<8xf32>
    %c0_4 = arith.constant 0 : index
    %c0_5 = arith.constant 0 : index
    %7 = vector.load %arg5[%c0_4, %c0_5] : memref<1x8xf32, #tpu.memory_space<vmem>>, vector<1x8xf32>
    %8 = vector.shape_cast %6 : vector<8xf32> to vector<1x8xf32>
    %9 = arith.addf %7, %8 : vector<1x8xf32>
    %c0_6 = arith.constant 0 : index
    %c0_7 = arith.constant 0 : index
    %10 = vector.load %arg5[%c0_6, %c0_7] : memref<1x8xf32, #tpu.memory_space<vmem>>, vector<1x8xf32>
    tpu.vector_store %arg5[%c0_6, %c0_7], %9 {strides = array<i32>} : memref<1x8xf32, #tpu.memory_space<vmem>>, vector<1x8xf32>,
    %c0_i32_8 = arith.constant 0 : i32
    %11 = arith.cmpi eq, %arg1, %c0_i32_8 : i32
    %12 = arith.extui %11 : i1 to i32
    %c0_i32_9 = arith.constant 0 : i32
    %13 = arith.cmpi ne, %12, %c0_i32_9 : i32
    scf.if %13 {
      %c0_10 = arith.constant 0 : index
      %c0_11 = arith.constant 0 : index
      %14 = vector.load %arg5[%c0_10, %c0_11] : memref<1x8xf32, #tpu.memory_space<vmem>>, vector<1x8xf32>
      %c0_12 = arith.constant 0 : index
      %c0_13 = arith.constant 0 : index
      %c0_14 = arith.constant 0 : index
      %15 = vector.load %arg4[%c0_12, %c0_13, %c0_14] : memref<1x1x8xf32, #tpu.memory_space<vmem>>, vector<1x1x8xf32>
      %16 = vector.shape_cast %15 : vector<1x1x8xf32> to vector<1x8xf32>
      %17 = vector.shape_cast %14 : vector<1x8xf32> to vector<1x1x8xf32>
      tpu.vector_store %arg4[%c0_12, %c0_13, %c0_14], %17 {strides = array<i32>} : memref<1x1x8xf32, #tpu.memory_space<vmem>>, vector<1x1x8xf32>,
    } else {
    }
    return
  }
  func.func @transform_0(%arg0: i32, %arg1: i32) -> (i32, i32) {
    %c0_i32 = arith.constant 0 : i32
    return %arg0, %arg1 : i32, i32
  }
  func.func @transform_1(%arg0: i32, %arg1: i32) -> (i32, i32) {
    %c0_i32 = arith.constant 0 : i32
    return %arg0, %arg1 : i32, i32
  }
  func.func @transform_2(%arg0: i32, %arg1: i32) -> (i32, i32, i32) {
    %c0_i32 = arith.constant 0 : i32
    %c0_i32_0 = arith.constant 0 : i32
    %c0_i32_1 = arith.constant 0 : i32
    return %arg0, %c0_i32, %c0_i32_0 : i32, i32, i32
  }
}

</mosaic_0001>

<llo_original>
// kernel: tpu_custom_call.1
$region0: #{tpu_custom_call.1}
  #allocation0 [shape = 'u32[]', space=smem, size = 0x4, offset = 0x4, fixed_abs, tag = 'smem constant byte address 0x4 - core index']
  #allocation1 [shape = 'u32[144,128]{1,0:T(1,128)}', space=vmem, size = 0x12000, scoped, tag = 'internal scratch']
  #allocation2 [shape = 'f32[1,8]{1,0:T(1,128)}', space=vmem, size = 0x200, scoped, tag = 'scratch operand']
  %s0 = inlined_call_operand.hbm [shape: f32[8,32], index: 0, kind: input, shape index: {}]
  %s1 = inlined_call_operand.hbm [shape: f32[8,32], index: 1, kind: input, shape index: {}]
  %s2 = inlined_call_operand.hbm [shape: f32[1,1,8], index: 2, kind: output, shape index: {}]
  %s3 = sld [smem:[#allocation0]]
  $region34: #{tpu_custom_call.1} parent=0
    _
  %s5 = ssub.s32 1, %s3
  %s6 = scalar_select 0, %s5, %s3
  $region1: #{tpu_custom_call.1} parent=0
    #allocation3 [shape = 'u8[4096]{0}', space=vmem, size = 0x1000, scoped, tag = 'input window, operand 0, single buffered']
    #allocation4 [shape = 's32[1]{0}', space=sflag, size = 0x4, scoped, tag = 'scoped memory for tpu_custom_call.1']
    #allocation5 [shape = 's32[1]{0}', space=sflag, size = 0x4, scoped, tag = 'scoped memory for tpu_custom_call.1']
    #allocation6 [shape = 'u8[4096]{0}', space=vmem, size = 0x1000, scoped, tag = 'input window, operand 1, single buffered']
    #allocation7 [shape = 's32[1]{0}', space=sflag, size = 0x4, scoped, tag = 'scoped memory for tpu_custom_call.1']
    #allocation8 [shape = 'u8[512]{0}', space=vmem, size = 0x400, scoped, tag = 'output window, operand 0, single buffered']
    %7 = vsyncpa [#allocation4], 0
    %8 = vsyncpa [#allocation7], 0
    %9 = vsyncpa [#allocation5], 0
    // Predicated region
    $region2: #{tpu_custom_call.1} parent=1 // pred_check
      _
    $region3: #{tpu_custom_call.1} parent=1 // pred_check_branch
      %11 = sbr.rel (0) target = $region5
    $region4: #{tpu_custom_call.1} parent=1 // pred_region
      %s13 = ssub.s32 128, 128
      %14 = vsyncadd [#allocation4], %s13
      %s16 = sshll.u32 [#allocation3], 4
      %s17 = int_to_ptr.vmem [resolvable:$true] %s16
      %19 = dma.hbm_to_vmem [thread:$0]  %s0, 128, %s17, [#allocation4]
    $region5: #{tpu_custom_call.1} parent=1 // pred_fallthru
      _
    // Predicated region
    $region6: #{tpu_custom_call.1} parent=1 // pred_check
      _
    $region7: #{tpu_custom_call.1} parent=1 // pred_check_branch
      %21 = sbr.rel (0) target = $region9
    $region8: #{tpu_custom_call.1} parent=1 // pred_region
      %s23 = ssub.s32 128, 128
      %24 = vsyncadd [#allocation7], %s23
      %s26 = sshll.u32 [#allocation6], 4
      %s27 = int_to_ptr.vmem [resolvable:$true] %s26
      %29 = dma.hbm_to_vmem [thread:$0]  %s1, 128, %s27, [#allocation7]
    $region9: #{tpu_custom_call.1} parent=1 // pred_fallthru
      _
    // Predicated region
    $region10: #{tpu_custom_call.1} parent=1 // pred_check
      _
    $region11: #{tpu_custom_call.1} parent=1 // pred_check_branch
      %31 = sbr.rel (0) target = $region13
    $region12: #{tpu_custom_call.1} parent=1 // pred_region
      %32 = dma.done [#allocation4], 128
    $region13: #{tpu_custom_call.1} parent=1 // pred_fallthru
      _
    // Predicated region
    $region14: #{tpu_custom_call.1} parent=1 // pred_check
      _
    $region15: #{tpu_custom_call.1} parent=1 // pred_check_branch
      %34 = sbr.rel (0) target = $region17
    $region16: #{tpu_custom_call.1} parent=1 // pred_region
      %35 = dma.done [#allocation7], 128
    $region17: #{tpu_custom_call.1} parent=1 // pred_fallthru
      _
    %p36 = scmp.eq.s32.totalorder 0, 0
    // Predicated region
    $region18: #{tpu_custom_call.1} parent=1 // pred_check
      %p37 = pneg %p36
    $region19: #{tpu_custom_call.1} parent=1 // pred_check_branch
      %39 = sbr.rel (%p37) target = $region21
    $region20: #{tpu_custom_call.1} parent=1 // pred_region
      %vm40 = vcmask 57344
      %41 = vst.msk [vmem:[#allocation2] sm:$0x1] %vm40, 0.0
    $region21: #{tpu_custom_call.1} parent=1 // pred_fallthru
      _
    %v42 = vld [vmem:[#allocation3] sm:$0xff]
    %v43 = vld [vmem:[#allocation6] sm:$0xff]
    %v44 = vmul.f32 %v42, %v43
    %vm45 = vcmask 261120
    %v46 = vsel %vm45, %v44, 0.0
    %47 = vadd.xlane.f32.xlu0 %v46
    %v48 = vpop.xlane.xlu0 %47
    %v49 = vld [vmem:[#allocation2] sm:$0x1]
    %v51 = vlaneseq
    %v52 = vshrl.u32 %v51, 7
    %v53 = vsub.s32 0, %v52
    %v54 = vrot.slane %v48, %v53
    %v55 = vlaneseq
    %v56 = vshrl.u32 %v55, 7
    %v57 = vsub.s32 1, %v56
    %v58 = vrot.slane %v48, %v57
    %v59 = vlaneseq
    %v60 = vshrl.u32 %v59, 7
    %v61 = vsub.s32 2, %v60
    %v62 = vrot.slane %v48, %v61
    %v63 = vlaneseq
    %v64 = vshrl.u32 %v63, 7
    %v65 = vsub.s32 3, %v64
    %v66 = vrot.slane %v48, %v65
    %v67 = vlaneseq
    %v68 = vshrl.u32 %v67, 7
    %v69 = vsub.s32 4, %v68
    %v70 = vrot.slane %v48, %v69
    %v71 = vlaneseq
    %v72 = vshrl.u32 %v71, 7
    %v73 = vsub.s32 5, %v72
    %v74 = vrot.slane %v48, %v73
    %v75 = vlaneseq
    %v76 = vshrl.u32 %v75, 7
    %v77 = vsub.s32 6, %v76
    %v78 = vrot.slane %v48, %v77
    %v79 = vlaneseq
    %v80 = vshrl.u32 %v79, 7
    %v81 = vsub.s32 7, %v80
    %v82 = vrot.slane %v48, %v81
    %v83 = vcombine.low %v54, %v58
    %v84 = vcombine.low %v62, %v66
    %v85 = vcombine.low %v70, %v74
    %v86 = vcombine.low %v78, %v82
    %v88 = vunpack.c.l.s4 1966171168
    %v89 = vunpack.c.0.s8 %v88
    %v90 = vlaneseq
    %v91 = vshrl.u32 %v90, 7
    %v92 = vsub.s32 %v89, %v91
    %v93 = vrot.slane %v83, %v92
    %v95 = vunpack.c.l.s4 1966171168
    %v96 = vunpack.c.0.s8 %v95
    %v97 = vlaneseq
    %v98 = vshrl.u32 %v97, 7
    %v99 = vsub.s32 %v96, %v98
    %v100 = vrot.slane %v84, %v99
    %v102 = vunpack.c.l.s4 1966171168
    %v103 = vunpack.c.0.s8 %v102
    %v104 = vlaneseq
    %v105 = vshrl.u32 %v104, 7
    %v106 = vsub.s32 %v103, %v105
    %v107 = vrot.slane %v85, %v106
    %v109 = vunpack.c.l.s4 1966171168
    %v110 = vunpack.c.0.s8 %v109
    %v111 = vlaneseq
    %v112 = vshrl.u32 %v111, 7
    %v113 = vsub.s32 %v110, %v112
    %v114 = vrot.slane %v86, %v113
    %v115 = vcombine.low %v93, %v100
    %v116 = vcombine.low %v107, %v114
    %v118 = vunpack.c.l.s4 1966171168
    %v119 = vunpack.c.0.s8 %v118
    %v120 = vlaneseq
    %v121 = vshrl.u32 %v120, 7
    %v122 = vsub.s32 %v119, %v121
    %v123 = vrot.slane %v115, %v122
    %v125 = vunpack.c.l.s4 1966171168
    %v126 = vunpack.c.0.s8 %v125
    %v127 = vlaneseq
    %v128 = vshrl.u32 %v127, 7
    %v129 = vsub.s32 %v126, %v128
    %v130 = vrot.slane %v116, %v129
    %v131 = vcombine.low %v123, %v130
    %132 = vset.pattern.permute.xlu0 0
    %133 = vperm.xlu0 %132, %v131
    %v134 = vpop.permute.xlu0 %133
    %v135 = vlaneseq
    %v136 = vand.u32 %v135, 127
    %v137 = vlaneseq
    %v138 = vshrl.u32 %v137, 7
    %v139 = vsub.s32 %v136, %v138
    %v140 = vrot.slane %v134, %v139
    %v142 = vunpack.c.l.s4 1966171168
    %v143 = vunpack.c.0.s8 %v142
    %v144 = vlaneseq
    %v145 = vshrl.u32 %v144, 7
    %v146 = vsub.s32 %v143, %v145
    %v147 = vrot.slane %v140, %v146
    %v149 = vunpack.c.l.s4 1966171168
    %v150 = vunpack.c.0.s8 %v149
    %v151 = vlaneseq
    %v152 = vshrl.u32 %v151, 7
    %v153 = vsub.s32 %v150, %v152
    %v154 = vrot.slane %v147, %v153
    %v156 = vadd.f32 %v49, %v154
    %vm157 = vcmask 57344
    %158 = vst.msk [vmem:[#allocation2] sm:$0x1] %vm157, %v156
    // Predicated region
    $region22: #{tpu_custom_call.1} parent=1 // pred_check
      %p159 = pneg %p36
    $region23: #{tpu_custom_call.1} parent=1 // pred_check_branch
      %161 = sbr.rel (%p159) target = $region25
    $region24: #{tpu_custom_call.1} parent=1 // pred_region
      %v162 = vld [vmem:[#allocation2] sm:$0x1]
      %163 = vst.msk [vmem:[#allocation8] sm:$0x1] %vm157, %v162
    $region25: #{tpu_custom_call.1} parent=1 // pred_fallthru
      _
    // Predicated region
    $region26: #{tpu_custom_call.1} parent=1 // pred_check
      _
    $region27: #{tpu_custom_call.1} parent=1 // pred_check_branch
      %165 = sbr.rel (0) target = $region29
    $region28: #{tpu_custom_call.1} parent=1 // pred_region
      %s167 = ssub.s32 16, 16
      %168 = vsyncadd [#allocation5], %s167
      %s170 = sshll.u32 [#allocation8], 4
      %s171 = int_to_ptr.vmem [resolvable:$true] %s170
      %173 = dma.vmem_to_hbm [thread:$0]  %s171, 16, %s2, [#allocation5]
    $region29: #{tpu_custom_call.1} parent=1 // pred_fallthru
      _
    // Predicated region
    $region30: #{tpu_custom_call.1} parent=1 // pred_check
      _
    $region31: #{tpu_custom_call.1} parent=1 // pred_check_branch
      %175 = sbr.rel (0) target = $region33
    $region32: #{tpu_custom_call.1} parent=1 // pred_region
      %176 = dma.done [#allocation5], 16
    $region33: #{tpu_custom_call.1} parent=1 // pred_fallthru
      _
    %177 = vsyncpa [#allocation4], 1
    %178 = vsyncpa [#allocation7], 1
    %179 = vsyncpa [#allocation5], 1

</llo_original>
